<compile_context>
chip_gen: v7x
topology: tpu7x:2x2x1
jax: 0.10.0
libtpu: 0.0.40
codegen_flags: <defaults>
</compile_context>

<pallas_src>
import functools

import jax
import jax.numpy as jnp
from jax import lax
from jax.experimental import pallas as pl
from jax.experimental.pallas import tpu as pltpu


def _pooler_kernel(x_ref, w_ref, b_ref, o_ref):
    # x_ref: [M, H]   resident across the N-grid (M = B * cls_count, tiny)
    # w_ref: [tn, H]  nn.Linear weight tile in [out, in] layout
    # b_ref: [1, tn]
    # o_ref: [M, tn]
    x = x_ref[...]
    w = w_ref[...]
    # Contract x's feature axis with w's in-feature axis: y = x @ W^T,
    # expressed without a transpose so the MXU eats W as-is.
    acc = lax.dot_general(
        x, w,
        dimension_numbers=(((1,), (1,)), ((), ())),
        preferred_element_type=jnp.float32,
    )
    acc = acc + b_ref[...].astype(jnp.float32)
    o_ref[...] = jnp.tanh(acc).astype(o_ref.dtype)


def _pick_tn(H, itemsize):
    """Largest lane-dense N-tile (multiple of 128) dividing H whose
    double-buffered weight tile stays <= ~16 MiB (safe on v7x's VMEM)."""
    for tn in (1024, 512, 256, 128):
        if H % tn == 0 and 2 * tn * H * itemsize <= 16 * 1024 * 1024:
            return tn
    # H has no suitable 128-multiple divisor (e.g. tiny test H=32):
    # fall back to a single full-width block (last dim == full array dim).
    return H


@functools.partial(jax.jit, static_argnames=("cls_count",))
def ext_bert_pooler(hidden_states, linear_weight, linear_bias, cls_count=1):
    """Pallas implementation of ExtBertPooler.forward (inference path).

    hidden_states: [B, S, H]
    linear_weight: [H, H]   (nn.Linear [out, in])
    linear_bias:   [H]
    returns:       [B, H] if cls_count == 1 else [B, cls_count, H]
    """
    B, S, H = hidden_states.shape
    assert 1 <= cls_count <= S

    # Glue: first cls_count tokens, flatten batch x cls (tiny M*H traffic).
    x = hidden_states[:, :cls_count, :].reshape(B * cls_count, H)
    b2d = linear_bias.reshape(1, H)

    M = B * cls_count
    tn = _pick_tn(H, jnp.dtype(linear_weight.dtype).itemsize)
    grid = (H // tn,)

    out = pl.pallas_call(
        _pooler_kernel,
        out_shape=jax.ShapeDtypeStruct((M, H), hidden_states.dtype),
        grid_spec=pltpu.PrefetchScalarGridSpec(
            num_scalar_prefetch=0,
            grid=grid,
            in_specs=[
                # x held resident across the N axis.
                pl.BlockSpec((M, H), lambda j: (0, 0)),
                # Weight streamed in lane-dense [tn, H] tiles (double-buffered).
                pl.BlockSpec((tn, H), lambda j: (j, 0)),
                pl.BlockSpec((1, tn), lambda j: (0, j)),
            ],
            out_specs=pl.BlockSpec((M, tn), lambda j: (0, j)),
        ),
        compiler_params=pltpu.CompilerParams(
            # Independent output tiles -> shard across v7x's 2 TensorCores;
            # harmless on v5e/v6e.
            dimension_semantics=("parallel",)
        ),
    )(x, linear_weight, b2d)

    out = out.reshape(B, cls_count, H)
    if cls_count == 1:
        out = out[:, 0, :]  # torch .squeeze(1)
    return out


if __name__ == "__main__":
    # Small shapes consistent with the module: batch=2, seq=8, hidden=32.
    B, S, H = 2, 8, 32
    initializer_range = 0.02

    key = jax.random.PRNGKey(0)
    k_hidden, k_w = jax.random.split(key)

    hidden_states = jax.random.normal(k_hidden, (B, S, H), dtype=jnp.float32)
    # Param init mirroring __init__: weight ~ N(0, initializer_range), bias 0.
    linear_weight = initializer_range * jax.random.normal(k_w, (H, H), dtype=jnp.float32)
    linear_bias = jnp.zeros((H,), dtype=jnp.float32)

    out = ext_bert_pooler(hidden_states, linear_weight, linear_bias, cls_count=1)
    out = jax.block_until_ready(out)

    # Reference check in plain JAX.
    ref = jnp.tanh(hidden_states[:, 0, :] @ linear_weight.T + linear_bias)
    assert out.shape == (B, H), out.shape
    assert jnp.allclose(out, ref, atol=1e-5, rtol=1e-5)

    # Also exercise cls_count > 1 path.
    out3 = ext_bert_pooler(hidden_states, linear_weight, linear_bias, cls_count=2)
    out3 = jax.block_until_ready(out3)
    ref3 = jnp.tanh(
        jnp.einsum("bch,oh->bco", hidden_states[:, :2, :], linear_weight) + linear_bias
    )
    assert out3.shape == (B, 2, H), out3.shape
    assert jnp.allclose(out3, ref3, atol=1e-5, rtol=1e-5)

    print("KERNEL_OK")
</pallas_src>

<mosaic_0001>
module attributes {stable_mosaic.version = 11 : i64} {
  func.func @_pooler_kernel(%arg0: i32, %arg1: memref<2x32xf32, #tpu.memory_space<vmem>>, %arg2: memref<32x32xf32, #tpu.memory_space<vmem>>, %arg3: memref<1x32xf32, #tpu.memory_space<vmem>>, %arg4: memref<2x32xf32, #tpu.memory_space<vmem>>) attributes {dimension_semantics = [#tpu.dimension_semantics<parallel>], iteration_bounds = array<i64: 1>, scalar_prefetch = 0 : i64, scratch_operands = 0 : i64, tpu.core_type = #tpu.core_type<tc>, window_params = [{pipeline_mode = #tpu.pipeline_mode<synchronous>, transform_indices = @transform_0, window_bounds = array<i64: 2, 32>}, {transform_indices = @transform_1, window_bounds = array<i64: 32, 32>}, {transform_indices = @transform_2, window_bounds = array<i64: 1, 32>}, {transform_indices = @transform_3, window_bounds = array<i64: 2, 32>}]} {
    %c0 = arith.constant 0 : index
    %c0_0 = arith.constant 0 : index
    %0 = vector.load %arg1[%c0, %c0_0] : memref<2x32xf32, #tpu.memory_space<vmem>>, vector<2x32xf32>
    %c0_1 = arith.constant 0 : index
    %c0_2 = arith.constant 0 : index
    %1 = vector.load %arg2[%c0_1, %c0_2] : memref<32x32xf32, #tpu.memory_space<vmem>>, vector<32x32xf32>
    %cst = arith.constant dense<0.000000e+00> : vector<2x32xf32>
    %2 = tpu.matmul %0, %1, %cst {dimension_numbers = #tpu.dot_dimension_numbers<[1], [1], [0], [0], [0, 0, 1, 0], [], []>} : vector<2x32xf32>, vector<32x32xf32>, vector<2x32xf32> -> vector<2x32xf32>
    %c0_3 = arith.constant 0 : index
    %c0_4 = arith.constant 0 : index
    %3 = vector.load %arg3[%c0_3, %c0_4] : memref<1x32xf32, #tpu.memory_space<vmem>>, vector<1x32xf32>
    %4 = vector.broadcast %3 : vector<1x32xf32> to vector<2x32xf32>
    %5 = arith.addf %2, %4 : vector<2x32xf32>
    %6 = math.tanh %5 : vector<2x32xf32>
    %c0_5 = arith.constant 0 : index
    %c0_6 = arith.constant 0 : index
    %7 = vector.load %arg4[%c0_5, %c0_6] : memref<2x32xf32, #tpu.memory_space<vmem>>, vector<2x32xf32>
    tpu.vector_store %arg4[%c0_5, %c0_6], %6 {strides = array<i32>} : memref<2x32xf32, #tpu.memory_space<vmem>>, vector<2x32xf32>,
    return
  }
  func.func @transform_0(%arg0: i32) -> (i32, i32) {
    %c0_i32 = arith.constant 0 : i32
    %c0_i32_0 = arith.constant 0 : i32
    %c0_i32_1 = arith.constant 0 : i32
    return %c0_i32, %c0_i32_0 : i32, i32
  }
  func.func @transform_1(%arg0: i32) -> (i32, i32) {
    %c0_i32 = arith.constant 0 : i32
    %c0_i32_0 = arith.constant 0 : i32
    return %arg0, %c0_i32 : i32, i32
  }
  func.func @transform_2(%arg0: i32) -> (i32, i32) {
    %c0_i32 = arith.constant 0 : i32
    %c0_i32_0 = arith.constant 0 : i32
    return %c0_i32, %arg0 : i32, i32
  }
  func.func @transform_3(%arg0: i32) -> (i32, i32) {
    %c0_i32 = arith.constant 0 : i32
    %c0_i32_0 = arith.constant 0 : i32
    return %c0_i32, %arg0 : i32, i32
  }
}

</mosaic_0001>

<llo_original>
// kernel: ext_bert_pooler.1
$region0: #{ext_bert_pooler.1}
  #allocation0 [shape = 'u32[]', space=smem, size = 0x4, offset = 0x4, fixed_abs, tag = 'smem constant byte address 0x4 - core index']
  #allocation1 [shape = 'u32[144,128]{1,0:T(1,128)}', space=vmem, size = 0x12000, scoped, tag = 'internal scratch']
  %s0 = inlined_call_operand.vmem [shape: f32[2,32], index: 0, kind: input, shape index: {}]
  %s1 = inlined_call_operand.hbm [shape: f32[32,32], index: 1, kind: input, shape index: {}]
  %s2 = inlined_call_operand.vmem [shape: f32[1,32], index: 2, kind: input, shape index: {}]
  %s3 = inlined_call_operand.hbm [shape: f32[2,32], index: 3, kind: output, shape index: {}]
  %s4 = sld [smem:[#allocation0]]
  $region26: #{ext_bert_pooler.1} parent=0
    _
  %s6 = ssub.s32 1, %s4
  %s7 = scalar_select 0, %s6, %s4
  $region1: #{ext_bert_pooler.1} parent=0
    #allocation2 [shape = 'u8[16384]{0}', space=vmem, size = 0x4000, scoped, tag = 'input window, operand 1, single buffered']
    #allocation3 [shape = 's32[1]{0}', space=sflag, size = 0x4, scoped, tag = 'scoped memory for ext_bert_pooler.1']
    #allocation4 [shape = 's32[1]{0}', space=sflag, size = 0x4, scoped, tag = 'scoped memory for ext_bert_pooler.1']
    #allocation5 [shape = 'u8[1024]{0}', space=vmem, size = 0x400, scoped, tag = 'output window, operand 0, single buffered']
    %8 = vsyncpa [#allocation3], 0
    %9 = vsyncpa [#allocation4], 0
    // Predicated region
    $region2: #{ext_bert_pooler.1} parent=1 // pred_check
      _
    $region3: #{ext_bert_pooler.1} parent=1 // pred_check_branch
      %11 = sbr.rel (0) target = $region5
    $region4: #{ext_bert_pooler.1} parent=1 // pred_region
      _
    $region5: #{ext_bert_pooler.1} parent=1 // pred_fallthru
      _
    // Predicated region
    $region6: #{ext_bert_pooler.1} parent=1 // pred_check
      _
    $region7: #{ext_bert_pooler.1} parent=1 // pred_check_branch
      %13 = sbr.rel (0) target = $region9
    $region8: #{ext_bert_pooler.1} parent=1 // pred_region
      %s15 = ssub.s32 512, 512
      %16 = vsyncadd [#allocation3], %s15
      %s17 = sshll.u32 [#allocation2], 4
      %s18 = int_to_ptr.vmem [resolvable:$true] %s17
      %23 = dma.hbm_to_vmem [thread:$0]  %s1, 512, %s18, [#allocation3], 128, 128, 8
    $region9: #{ext_bert_pooler.1} parent=1 // pred_fallthru
      _
    // Predicated region
    $region10: #{ext_bert_pooler.1} parent=1 // pred_check
      _
    $region11: #{ext_bert_pooler.1} parent=1 // pred_check_branch
      %25 = sbr.rel (0) target = $region13
    $region12: #{ext_bert_pooler.1} parent=1 // pred_region
      _
    $region13: #{ext_bert_pooler.1} parent=1 // pred_fallthru
      _
    // Predicated region
    $region14: #{ext_bert_pooler.1} parent=1 // pred_check
      _
    $region15: #{ext_bert_pooler.1} parent=1 // pred_check_branch
      %27 = sbr.rel (0) target = $region17
    $region16: #{ext_bert_pooler.1} parent=1 // pred_region
      %28 = dma.done [#allocation3], 512
    $region17: #{ext_bert_pooler.1} parent=1 // pred_fallthru
      _
    %v29 = vld [vmem:[%s0] sm:$0x3]
    %v30 = vld [vmem:[#allocation2] sm:$0xff]
    %v31 = vld [vmem:[#allocation2 + $0x8] sm:$0xff]
    %v32 = vld [vmem:[#allocation2 + $0x10] sm:$0xff]
    %v33 = vld [vmem:[#allocation2 + $0x18] sm:$0xff]
    %v34 = vld [vmem:[%s2] sm:$0x1]
    %v36 = vlaneseq
    %v37 = vshrl.u32 %v36, 7
    %v38 = vsub.s32 0, %v37
    %v39 = vrot.slane %v34, %v38
    %vm41 = vcmask 261120
    %v43 = vsel %vm41, %v29, 0
    %v46 = vsel %vm41, %v30, 0
    %v49 = vsel %vm41, %v31, 0
    %v52 = vsel %vm41, %v32, 0
    %v55 = vsel %vm41, %v33, 0
    %57 = vmatprep.subr.mxu0 0.0
    %58 = vmatpush1.xpose.msra.mxu0 %v46
    %59 = vmatprep.subr.mxu0 0.0
    %60 = vmatpush1.xpose.msra.mxu0 %v49
    %61 = vmatprep.subr.mxu0 0.0
    %62 = vmatpush1.xpose.msra.mxu0 %v52
    %63 = vmatprep.subr.mxu0 0.0
    %64 = vmatpush1.xpose.msra.mxu0 %v55
    %65 = vmatprep.subr.mxu0 0.0
    %66 = vmatpush1.xpose.msra.mxu0 0.0
    %67 = vmatprep.subr.mxu0 0.0
    %68 = vmatpush1.xpose.msra.mxu0 0.0
    %69 = vmatprep.subr.mxu0 0.0
    %70 = vmatpush1.xpose.msra.mxu0 0.0
    %71 = vmatprep.subr.mxu0 0.0
    %72 = vmatpush1.xpose.msra.mxu0 0.0
    %73 = vmatprep.subr.mxu0 0.0
    %74 = vmatpush1.xpose.msra.mxu0 0.0
    %75 = vmatprep.subr.mxu0 0.0
    %76 = vmatpush1.xpose.msra.mxu0 0.0
    %77 = vmatprep.subr.mxu0 0.0
    %78 = vmatpush1.xpose.msra.mxu0 0.0
    %79 = vmatprep.subr.mxu0 0.0
    %80 = vmatpush1.xpose.msra.mxu0 0.0
    %81 = vmatprep.subr.mxu0 0.0
    %82 = vmatpush1.xpose.msra.mxu0 0.0
    %83 = vmatprep.subr.mxu0 0.0
    %84 = vmatpush1.xpose.msra.mxu0 0.0
    %85 = vmatprep.subr.mxu0 0.0
    %86 = vmatpush1.xpose.msra.mxu0 0.0
    %87 = vmatprep.subr.mxu0 0.0
    %88 = vmatpush1.xpose.msra.mxu0 0.0
    %89 = vmatprep.subr.mxu0 0.0
    %90 = vmatpush1.xpose.msra.mxu0 0.0
    %91 = vmatprep.subr.mxu0 0.0
    %92 = vmatpush1.xpose.msra.mxu0 0.0
    %93 = vmatprep.subr.mxu0 0.0
    %94 = vmatpush1.xpose.msra.mxu0 0.0
    %95 = vmatprep.subr.mxu0 0.0
    %96 = vmatpush1.xpose.msra.mxu0 0.0
    %97 = vmatprep.subr.mxu0 0.0
    %98 = vmatpush1.xpose.msra.mxu0 0.0
    %99 = vmatprep.subr.mxu0 0.0
    %100 = vmatpush1.xpose.msra.mxu0 0.0
    %101 = vmatprep.subr.mxu0 0.0
    %102 = vmatpush1.xpose.msra.mxu0 0.0
    %103 = vmatprep.subr.mxu0 0.0
    %104 = vmatpush1.xpose.msra.mxu0 0.0
    %105 = vmatprep.subr.mxu0 0.0
    %106 = vmatpush1.xpose.msra.mxu0 0.0
    %107 = vmatprep.subr.mxu0 0.0
    %108 = vmatpush1.xpose.msra.mxu0 0.0
    %109 = vmatprep.subr.mxu0 0.0
    %110 = vmatpush1.xpose.msra.mxu0 0.0
    %111 = vmatprep.subr.mxu0 0.0
    %112 = vmatpush1.xpose.msra.mxu0 0.0
    %113 = vmatprep.subr.mxu0 0.0
    %114 = vmatpush1.xpose.msra.mxu0 0.0
    %115 = vmatprep.subr.mxu0 0.0
    %116 = vmatpush1.xpose.msra.mxu0 0.0
    %117 = vmatprep.subr.mxu0 0.0
    %118 = vmatpush1.xpose.msra.mxu0 0.0
    %119 = vmatprep.subr.mxu0 0.0
    %120 = vmatpush1.xpose.msra.mxu0 0.0
    %121 = vmatprep.mubr.f32.mxu0 0.0
    %122 = vmatmul.mubr.f32.gmra.mrb[0].mxu0 %v43
    %v123 = vpop.f32.mrb[0].mxu0
    %v124 = vadd.f32 %v39, %v123
    %v125 = vpop.f32.mrb[0].mxu0
    %126 = vdwg.mxu0
    %v127 = vtanh.pop %v124
    %vm128 = vcmask 254976
    %129 = vst.msk [vmem:[#allocation5] sm:$0x3] %vm128, %v127
    // Predicated region
    $region18: #{ext_bert_pooler.1} parent=1 // pred_check
      _
    $region19: #{ext_bert_pooler.1} parent=1 // pred_check_branch
      %131 = sbr.rel (0) target = $region21
    $region20: #{ext_bert_pooler.1} parent=1 // pred_region
      %s133 = ssub.s32 32, 32
      %134 = vsyncadd [#allocation4], %s133
      %s136 = sshll.u32 [#allocation5], 4
      %s137 = int_to_ptr.vmem [resolvable:$true] %s136
      %139 = dma.vmem_to_hbm [thread:$0]  %s137, 32, %s3, [#allocation4]
    $region21: #{ext_bert_pooler.1} parent=1 // pred_fallthru
      _
    // Predicated region
    $region22: #{ext_bert_pooler.1} parent=1 // pred_check
      _
    $region23: #{ext_bert_pooler.1} parent=1 // pred_check_branch
      %141 = sbr.rel (0) target = $region25
    $region24: #{ext_bert_pooler.1} parent=1 // pred_region
      %142 = dma.done [#allocation4], 32
    $region25: #{ext_bert_pooler.1} parent=1 // pred_fallthru
      _
    %143 = vsyncpa [#allocation3], 1
    %144 = vsyncpa [#allocation4], 1

</llo_original>
